<compile_context>
chip_gen: v6e
topology: v6e:2x2x1
jax: 0.10.0
libtpu: 0.0.40
codegen_flags: <defaults>
</compile_context>

<pallas_src>
import jax
import jax.numpy as jnp
from jax.experimental import pallas as pl
from jax.experimental.pallas import tpu as pltpu


def _lstm_head_kernel(x_ref, wih_ref, whh_ref, b_ref, wout_ref, bout_ref,
                      out_ref):
    """Whole forward pass in one invocation.

    x_ref    : (T*B, D)  time-major rows [t0b0, t0b1, t1b0, ...]
    wih_ref  : (D, 4H)   W_ih^T
    whh_ref  : (H, 4H)   W_hh^T
    b_ref    : (1, 4H)   b_ih + b_hh
    wout_ref : (H, C)    W_out^T
    bout_ref : (1, C)    b_out
    out_ref  : (B, C)    log-probs

    Gate order matches PyTorch nn.LSTM: [i, f, g, o] along the 4H axis.
    """
    TB, _ = x_ref.shape
    H = whh_ref.shape[0]
    B = out_ref.shape[0]
    T = TB // B

    # Hoisted input projection: all time steps in one MXU pass, bias folded in.
    x_proj = (jnp.dot(x_ref[...], wih_ref[...],
                      preferred_element_type=jnp.float32)
              + b_ref[...])                                  # (T*B, 4H)

    whh = whh_ref[...]                                       # loaded once

    h = jnp.zeros((B, H), jnp.float32)
    c = jnp.zeros((B, H), jnp.float32)

    # Fully unrolled recurrence; only h @ W_hh^T remains on the sequential path.
    for t in range(T):
        gates = x_proj[t * B:(t + 1) * B, :] + jnp.dot(
            h, whh, preferred_element_type=jnp.float32)      # (B, 4H)
        # One sigmoid covers i, f, o (g's sigmoid lanes are discarded);
        # one tanh for g.  2 EUP activations per step instead of 4.
        sig = jax.nn.sigmoid(gates)                          # (B, 4H)
        i_g = sig[:, 0:H]
        f_g = sig[:, H:2 * H]
        o_g = sig[:, 3 * H:4 * H]
        g_g = jnp.tanh(gates[:, 2 * H:3 * H])
        c = f_g * c + i_g * g_g
        h = o_g * jnp.tanh(c)

    # Linear head + numerically-stable log-softmax on rnn_out[-1].
    logits = jnp.dot(h, wout_ref[...],
                     preferred_element_type=jnp.float32) + bout_ref[...]
    m = jnp.max(logits, axis=1, keepdims=True)
    shifted = logits - m
    lse = jnp.log(jnp.sum(jnp.exp(shifted), axis=1, keepdims=True))
    out_ref[...] = shifted - lse


def rnn_forward(x, w_ih, w_hh, b_ih, b_hh, w_out, b_out):
    """x: (T, B, D) float32, seq-major like PyTorch nn.LSTM default.
    Returns log-probs (B, n_cls)."""
    T, B, D = x.shape
    H4 = w_ih.shape[0]
    H = H4 // 4
    n_cls = w_out.shape[0]

    # Wrapper-side glue only (transposes / reshapes / casts), no compute.
    wih_t = jnp.transpose(w_ih).astype(jnp.float32)          # (D, 4H)
    whh_t = jnp.transpose(w_hh).astype(jnp.float32)          # (H, 4H)
    b_sum = (b_ih + b_hh).reshape(1, 4 * H).astype(jnp.float32)
    wout_t = jnp.transpose(w_out).astype(jnp.float32)        # (H, n_cls)
    bout = b_out.reshape(1, n_cls).astype(jnp.float32)
    x_flat = x.reshape(T * B, D).astype(jnp.float32)         # (T*B, D)

    vmem = lambda: pl.BlockSpec(memory_space=pltpu.MemorySpace.VMEM)

    return pl.pallas_call(
        _lstm_head_kernel,
        out_shape=jax.ShapeDtypeStruct((B, n_cls), jnp.float32),
        in_specs=[vmem() for _ in range(6)],
        out_specs=vmem(),
    )(x_flat, wih_t, whh_t, b_sum, wout_t, bout)


def rnn_forward_ref(x, w_ih, w_hh, b_ih, b_hh, w_out, b_out):
    """Pure-JAX reference of the same forward pass (for a sanity check)."""
    T, B, D = x.shape
    H = w_hh.shape[1]
    h = jnp.zeros((B, H), jnp.float32)
    c = jnp.zeros((B, H), jnp.float32)

    def step(carry, x_t):
        h, c = carry
        gates = x_t @ w_ih.T + h @ w_hh.T + b_ih + b_hh
        i = jax.nn.sigmoid(gates[:, 0:H])
        f = jax.nn.sigmoid(gates[:, H:2 * H])
        g = jnp.tanh(gates[:, 2 * H:3 * H])
        o = jax.nn.sigmoid(gates[:, 3 * H:4 * H])
        c = f * c + i * g
        h = o * jnp.tanh(c)
        return (h, c), None

    (h, _), _ = jax.lax.scan(step, (h, c), x)
    logits = h @ w_out.T + b_out
    return jax.nn.log_softmax(logits, axis=1)


if __name__ == "__main__":
    # Small shapes consistent with the module: seq=8, batch=2, input_dim=16, h=32.
    T, B, D, H = 8, 2, 16, 32
    N_CLS = 5

    key = jax.random.PRNGKey(0)
    ks = jax.random.split(key, 8)
    bound = 1.0 / jnp.sqrt(H)

    x = jax.random.normal(ks[0], (T, B, D), jnp.float32)
    w_ih = jax.random.uniform(ks[1], (4 * H, D), jnp.float32, -bound, bound)
    w_hh = jax.random.uniform(ks[2], (4 * H, H), jnp.float32, -bound, bound)
    b_ih = jax.random.uniform(ks[3], (4 * H,), jnp.float32, -bound, bound)
    b_hh = jax.random.uniform(ks[4], (4 * H,), jnp.float32, -bound, bound)
    w_out = jax.random.uniform(ks[5], (N_CLS, H), jnp.float32, -bound, bound)
    b_out = jax.random.uniform(ks[6], (N_CLS,), jnp.float32, -bound, bound)

    out = rnn_forward(x, w_ih, w_hh, b_ih, b_hh, w_out, b_out)
    out = jax.block_until_ready(out)

    ref = jax.block_until_ready(
        rnn_forward_ref(x, w_ih, w_hh, b_ih, b_hh, w_out, b_out))
    assert out.shape == (B, N_CLS)
    assert jnp.allclose(out, ref, atol=1e-5, rtol=1e-5), "mismatch vs JAX reference"

    print("KERNEL_OK")
</pallas_src>

<mosaic_0001>
module attributes {stable_mosaic.version = 11 : i64} {
  func.func @_lstm_head_kernel(%arg0: memref<16x16xf32, #tpu.memory_space<vmem>>, %arg1: memref<16x128xf32, #tpu.memory_space<vmem>>, %arg2: memref<32x128xf32, #tpu.memory_space<vmem>>, %arg3: memref<1x128xf32, #tpu.memory_space<vmem>>, %arg4: memref<32x5xf32, #tpu.memory_space<vmem>>, %arg5: memref<1x5xf32, #tpu.memory_space<vmem>>, %arg6: memref<2x5xf32, #tpu.memory_space<vmem>>) attributes {dimension_semantics = [], scalar_prefetch = 0 : i64, scratch_operands = 0 : i64, tpu.core_type = #tpu.core_type<tc>} {
    %c0 = arith.constant 0 : index
    %c0_0 = arith.constant 0 : index
    %0 = vector.load %arg0[%c0, %c0_0] : memref<16x16xf32, #tpu.memory_space<vmem>>, vector<16x16xf32>
    %c0_1 = arith.constant 0 : index
    %c0_2 = arith.constant 0 : index
    %1 = vector.load %arg1[%c0_1, %c0_2] : memref<16x128xf32, #tpu.memory_space<vmem>>, vector<16x128xf32>
    %cst = arith.constant dense<0.000000e+00> : vector<16x128xf32>
    %2 = tpu.matmul %0, %1, %cst {dimension_numbers = #tpu.dot_dimension_numbers<[1], [0], [0], [1], [0, 0, 1, 1], [], []>} : vector<16x16xf32>, vector<16x128xf32>, vector<16x128xf32> -> vector<16x128xf32>
    %c0_3 = arith.constant 0 : index
    %c0_4 = arith.constant 0 : index
    %3 = vector.load %arg3[%c0_3, %c0_4] : memref<1x128xf32, #tpu.memory_space<vmem>>, vector<1x128xf32>
    %4 = vector.broadcast %3 : vector<1x128xf32> to vector<16x128xf32>
    %5 = arith.addf %2, %4 : vector<16x128xf32>
    %c0_5 = arith.constant 0 : index
    %c0_6 = arith.constant 0 : index
    %6 = vector.load %arg2[%c0_5, %c0_6] : memref<32x128xf32, #tpu.memory_space<vmem>>, vector<32x128xf32>
    %cst_7 = arith.constant 0.000000e+00 : f32
    %7 = vector.broadcast %cst_7 : f32 to vector<2x32xf32>
    %cst_8 = arith.constant 0.000000e+00 : f32
    %8 = vector.broadcast %cst_8 : f32 to vector<2x32xf32>
    %9 = vector.extract_strided_slice %5 {offsets = [0, 0], sizes = [2, 128], strides = [1, 1]} : vector<16x128xf32> to vector<2x128xf32>
    %cst_9 = arith.constant dense<0.000000e+00> : vector<2x128xf32>
    %10 = tpu.matmul %7, %6, %cst_9 {dimension_numbers = #tpu.dot_dimension_numbers<[1], [0], [0], [1], [0, 0, 1, 1], [], []>} : vector<2x32xf32>, vector<32x128xf32>, vector<2x128xf32> -> vector<2x128xf32>
    %11 = arith.addf %9, %10 : vector<2x128xf32>
    %12 = arith.negf %11 : vector<2x128xf32>
    %13 = math.exp %12 : vector<2x128xf32>
    %cst_10 = arith.constant 1.000000e+00 : f32
    %14 = vector.broadcast %cst_10 : f32 to vector<2x128xf32>
    %15 = arith.addf %14, %13 : vector<2x128xf32>
    %16 = arith.divf %14, %15 : vector<2x128xf32>
    %17 = vector.extract_strided_slice %16 {offsets = [0, 0], sizes = [2, 32], strides = [1, 1]} : vector<2x128xf32> to vector<2x32xf32>
    %18 = vector.extract_strided_slice %16 {offsets = [0, 32], sizes = [2, 32], strides = [1, 1]} : vector<2x128xf32> to vector<2x32xf32>
    %19 = vector.extract_strided_slice %16 {offsets = [0, 96], sizes = [2, 32], strides = [1, 1]} : vector<2x128xf32> to vector<2x32xf32>
    %20 = vector.extract_strided_slice %11 {offsets = [0, 64], sizes = [2, 32], strides = [1, 1]} : vector<2x128xf32> to vector<2x32xf32>
    %21 = math.tanh %20 : vector<2x32xf32>
    %22 = arith.mulf %18, %8 : vector<2x32xf32>
    %23 = arith.mulf %17, %21 : vector<2x32xf32>
    %24 = arith.addf %22, %23 : vector<2x32xf32>
    %25 = math.tanh %24 : vector<2x32xf32>
    %26 = arith.mulf %19, %25 : vector<2x32xf32>
    %27 = vector.extract_strided_slice %5 {offsets = [2, 0], sizes = [2, 128], strides = [1, 1]} : vector<16x128xf32> to vector<2x128xf32>
    %cst_11 = arith.constant dense<0.000000e+00> : vector<2x128xf32>
    %28 = tpu.matmul %26, %6, %cst_11 {dimension_numbers = #tpu.dot_dimension_numbers<[1], [0], [0], [1], [0, 0, 1, 1], [], []>} : vector<2x32xf32>, vector<32x128xf32>, vector<2x128xf32> -> vector<2x128xf32>
    %29 = arith.addf %27, %28 : vector<2x128xf32>
    %30 = arith.negf %29 : vector<2x128xf32>
    %31 = math.exp %30 : vector<2x128xf32>
    %cst_12 = arith.constant 1.000000e+00 : f32
    %32 = vector.broadcast %cst_12 : f32 to vector<2x128xf32>
    %33 = arith.addf %32, %31 : vector<2x128xf32>
    %34 = arith.divf %32, %33 : vector<2x128xf32>
    %35 = vector.extract_strided_slice %34 {offsets = [0, 0], sizes = [2, 32], strides = [1, 1]} : vector<2x128xf32> to vector<2x32xf32>
    %36 = vector.extract_strided_slice %34 {offsets = [0, 32], sizes = [2, 32], strides = [1, 1]} : vector<2x128xf32> to vector<2x32xf32>
    %37 = vector.extract_strided_slice %34 {offsets = [0, 96], sizes = [2, 32], strides = [1, 1]} : vector<2x128xf32> to vector<2x32xf32>
    %38 = vector.extract_strided_slice %29 {offsets = [0, 64], sizes = [2, 32], strides = [1, 1]} : vector<2x128xf32> to vector<2x32xf32>
    %39 = math.tanh %38 : vector<2x32xf32>
    %40 = arith.mulf %36, %24 : vector<2x32xf32>
    %41 = arith.mulf %35, %39 : vector<2x32xf32>
    %42 = arith.addf %40, %41 : vector<2x32xf32>
    %43 = math.tanh %42 : vector<2x32xf32>
    %44 = arith.mulf %37, %43 : vector<2x32xf32>
    %45 = vector.extract_strided_slice %5 {offsets = [4, 0], sizes = [2, 128], strides = [1, 1]} : vector<16x128xf32> to vector<2x128xf32>
    %cst_13 = arith.constant dense<0.000000e+00> : vector<2x128xf32>
    %46 = tpu.matmul %44, %6, %cst_13 {dimension_numbers = #tpu.dot_dimension_numbers<[1], [0], [0], [1], [0, 0, 1, 1], [], []>} : vector<2x32xf32>, vector<32x128xf32>, vector<2x128xf32> -> vector<2x128xf32>
    %47 = arith.addf %45, %46 : vector<2x128xf32>
    %48 = arith.negf %47 : vector<2x128xf32>
    %49 = math.exp %48 : vector<2x128xf32>
    %cst_14 = arith.constant 1.000000e+00 : f32
    %50 = vector.broadcast %cst_14 : f32 to vector<2x128xf32>
    %51 = arith.addf %50, %49 : vector<2x128xf32>
    %52 = arith.divf %50, %51 : vector<2x128xf32>
    %53 = vector.extract_strided_slice %52 {offsets = [0, 0], sizes = [2, 32], strides = [1, 1]} : vector<2x128xf32> to vector<2x32xf32>
    %54 = vector.extract_strided_slice %52 {offsets = [0, 32], sizes = [2, 32], strides = [1, 1]} : vector<2x128xf32> to vector<2x32xf32>
    %55 = vector.extract_strided_slice %52 {offsets = [0, 96], sizes = [2, 32], strides = [1, 1]} : vector<2x128xf32> to vector<2x32xf32>
    %56 = vector.extract_strided_slice %47 {offsets = [0, 64], sizes = [2, 32], strides = [1, 1]} : vector<2x128xf32> to vector<2x32xf32>
    %57 = math.tanh %56 : vector<2x32xf32>
    %58 = arith.mulf %54, %42 : vector<2x32xf32>
    %59 = arith.mulf %53, %57 : vector<2x32xf32>
    %60 = arith.addf %58, %59 : vector<2x32xf32>
    %61 = math.tanh %60 : vector<2x32xf32>
    %62 = arith.mulf %55, %61 : vector<2x32xf32>
    %63 = vector.extract_strided_slice %5 {offsets = [6, 0], sizes = [2, 128], strides = [1, 1]} : vector<16x128xf32> to vector<2x128xf32>
    %cst_15 = arith.constant dense<0.000000e+00> : vector<2x128xf32>
    %64 = tpu.matmul %62, %6, %cst_15 {dimension_numbers = #tpu.dot_dimension_numbers<[1], [0], [0], [1], [0, 0, 1, 1], [], []>} : vector<2x32xf32>, vector<32x128xf32>, vector<2x128xf32> -> vector<2x128xf32>
    %65 = arith.addf %63, %64 : vector<2x128xf32>
    %66 = arith.negf %65 : vector<2x128xf32>
    %67 = math.exp %66 : vector<2x128xf32>
    %cst_16 = arith.constant 1.000000e+00 : f32
    %68 = vector.broadcast %cst_16 : f32 to vector<2x128xf32>
    %69 = arith.addf %68, %67 : vector<2x128xf32>
    %70 = arith.divf %68, %69 : vector<2x128xf32>
    %71 = vector.extract_strided_slice %70 {offsets = [0, 0], sizes = [2, 32], strides = [1, 1]} : vector<2x128xf32> to vector<2x32xf32>
    %72 = vector.extract_strided_slice %70 {offsets = [0, 32], sizes = [2, 32], strides = [1, 1]} : vector<2x128xf32> to vector<2x32xf32>
    %73 = vector.extract_strided_slice %70 {offsets = [0, 96], sizes = [2, 32], strides = [1, 1]} : vector<2x128xf32> to vector<2x32xf32>
    %74 = vector.extract_strided_slice %65 {offsets = [0, 64], sizes = [2, 32], strides = [1, 1]} : vector<2x128xf32> to vector<2x32xf32>
    %75 = math.tanh %74 : vector<2x32xf32>
    %76 = arith.mulf %72, %60 : vector<2x32xf32>
    %77 = arith.mulf %71, %75 : vector<2x32xf32>
    %78 = arith.addf %76, %77 : vector<2x32xf32>
    %79 = math.tanh %78 : vector<2x32xf32>
    %80 = arith.mulf %73, %79 : vector<2x32xf32>
    %81 = vector.extract_strided_slice %5 {offsets = [8, 0], sizes = [2, 128], strides = [1, 1]} : vector<16x128xf32> to vector<2x128xf32>
    %cst_17 = arith.constant dense<0.000000e+00> : vector<2x128xf32>
    %82 = tpu.matmul %80, %6, %cst_17 {dimension_numbers = #tpu.dot_dimension_numbers<[1], [0], [0], [1], [0, 0, 1, 1], [], []>} : vector<2x32xf32>, vector<32x128xf32>, vector<2x128xf32> -> vector<2x128xf32>
    %83 = arith.addf %81, %82 : vector<2x128xf32>
    %84 = arith.negf %83 : vector<2x128xf32>
    %85 = math.exp %84 : vector<2x128xf32>
    %cst_18 = arith.constant 1.000000e+00 : f32
    %86 = vector.broadcast %cst_18 : f32 to vector<2x128xf32>
    %87 = arith.addf %86, %85 : vector<2x128xf32>
    %88 = arith.divf %86, %87 : vector<2x128xf32>
    %89 = vector.extract_strided_slice %88 {offsets = [0, 0], sizes = [2, 32], strides = [1, 1]} : vector<2x128xf32> to vector<2x32xf32>
    %90 = vector.extract_strided_slice %88 {offsets = [0, 32], sizes = [2, 32], strides = [1, 1]} : vector<2x128xf32> to vector<2x32xf32>
    %91 = vector.extract_strided_slice %88 {offsets = [0, 96], sizes = [2, 32], strides = [1, 1]} : vector<2x128xf32> to vector<2x32xf32>
    %92 = vector.extract_strided_slice %83 {offsets = [0, 64], sizes = [2, 32], strides = [1, 1]} : vector<2x128xf32> to vector<2x32xf32>
    %93 = math.tanh %92 : vector<2x32xf32>
    %94 = arith.mulf %90, %78 : vector<2x32xf32>
    %95 = arith.mulf %89, %93 : vector<2x32xf32>
    %96 = arith.addf %94, %95 : vector<2x32xf32>
    %97 = math.tanh %96 : vector<2x32xf32>
    %98 = arith.mulf %91, %97 : vector<2x32xf32>
    %99 = vector.extract_strided_slice %5 {offsets = [10, 0], sizes = [2, 128], strides = [1, 1]} : vector<16x128xf32> to vector<2x128xf32>
    %cst_19 = arith.constant dense<0.000000e+00> : vector<2x128xf32>
    %100 = tpu.matmul %98, %6, %cst_19 {dimension_numbers = #tpu.dot_dimension_numbers<[1], [0], [0], [1], [0, 0, 1, 1], [], []>} : vector<2x32xf32>, vector<32x128xf32>, vector<2x128xf32> -> vector<2x128xf32>
    %101 = arith.addf %99, %100 : vector<2x128xf32>
    %102 = arith.negf %101 : vector<2x128xf32>
    %103 = math.exp %102 : vector<2x128xf32>
    %cst_20 = arith.constant 1.000000e+00 : f32
    %104 = vector.broadcast %cst_20 : f32 to vector<2x128xf32>
    %105 = arith.addf %104, %103 : vector<2x128xf32>
    %106 = arith.divf %104, %105 : vector<2x128xf32>
    %107 = vector.extract_strided_slice %106 {offsets = [0, 0], sizes = [2, 32], strides = [1, 1]} : vector<2x128xf32> to vector<2x32xf32>
    %108 = vector.extract_strided_slice %106 {offsets = [0, 32], sizes = [2, 32], strides = [1, 1]} : vector<2x128xf32> to vector<2x32xf32>
    %109 = vector.extract_strided_slice %106 {offsets = [0, 96], sizes = [2, 32], strides = [1, 1]} : vector<2x128xf32> to vector<2x32xf32>
    %110 = vector.extract_strided_slice %101 {offsets = [0, 64], sizes = [2, 32], strides = [1, 1]} : vector<2x128xf32> to vector<2x32xf32>
    %111 = math.tanh %110 : vector<2x32xf32>
    %112 = arith.mulf %108, %96 : vector<2x32xf32>
    %113 = arith.mulf %107, %111 : vector<2x32xf32>
    %114 = arith.addf %112, %113 : vector<2x32xf32>
    %115 = math.tanh %114 : vector<2x32xf32>
    %116 = arith.mulf %109, %115 : vector<2x32xf32>
    %117 = vector.extract_strided_slice %5 {offsets = [12, 0], sizes = [2, 128], strides = [1, 1]} : vector<16x128xf32> to vector<2x128xf32>
    %cst_21 = arith.constant dense<0.000000e+00> : vector<2x128xf32>
    %118 = tpu.matmul %116, %6, %cst_21 {dimension_numbers = #tpu.dot_dimension_numbers<[1], [0], [0], [1], [0, 0, 1, 1], [], []>} : vector<2x32xf32>, vector<32x128xf32>, vector<2x128xf32> -> vector<2x128xf32>
    %119 = arith.addf %117, %118 : vector<2x128xf32>
    %120 = arith.negf %119 : vector<2x128xf32>
    %121 = math.exp %120 : vector<2x128xf32>
    %cst_22 = arith.constant 1.000000e+00 : f32
    %122 = vector.broadcast %cst_22 : f32 to vector<2x128xf32>
    %123 = arith.addf %122, %121 : vector<2x128xf32>
    %124 = arith.divf %122, %123 : vector<2x128xf32>
    %125 = vector.extract_strided_slice %124 {offsets = [0, 0], sizes = [2, 32], strides = [1, 1]} : vector<2x128xf32> to vector<2x32xf32>
    %126 = vector.extract_strided_slice %124 {offsets = [0, 32], sizes = [2, 32], strides = [1, 1]} : vector<2x128xf32> to vector<2x32xf32>
    %127 = vector.extract_strided_slice %124 {offsets = [0, 96], sizes = [2, 32], strides = [1, 1]} : vector<2x128xf32> to vector<2x32xf32>
    %128 = vector.extract_strided_slice %119 {offsets = [0, 64], sizes = [2, 32], strides = [1, 1]} : vector<2x128xf32> to vector<2x32xf32>
    %129 = math.tanh %128 : vector<2x32xf32>
    %130 = arith.mulf %126, %114 : vector<2x32xf32>
    %131 = arith.mulf %125, %129 : vector<2x32xf32>
    %132 = arith.addf %130, %131 : vector<2x32xf32>
    %133 = math.tanh %132 : vector<2x32xf32>
    %134 = arith.mulf %127, %133 : vector<2x32xf32>
    %135 = vector.extract_strided_slice %5 {offsets = [14, 0], sizes = [2, 128], strides = [1, 1]} : vector<16x128xf32> to vector<2x128xf32>
    %cst_23 = arith.constant dense<0.000000e+00> : vector<2x128xf32>
    %136 = tpu.matmul %134, %6, %cst_23 {dimension_numbers = #tpu.dot_dimension_numbers<[1], [0], [0], [1], [0, 0, 1, 1], [], []>} : vector<2x32xf32>, vector<32x128xf32>, vector<2x128xf32> -> vector<2x128xf32>
    %137 = arith.addf %135, %136 : vector<2x128xf32>
    %138 = arith.negf %137 : vector<2x128xf32>
    %139 = math.exp %138 : vector<2x128xf32>
    %cst_24 = arith.constant 1.000000e+00 : f32
    %140 = vector.broadcast %cst_24 : f32 to vector<2x128xf32>
    %141 = arith.addf %140, %139 : vector<2x128xf32>
    %142 = arith.divf %140, %141 : vector<2x128xf32>
    %143 = vector.extract_strided_slice %142 {offsets = [0, 0], sizes = [2, 32], strides = [1, 1]} : vector<2x128xf32> to vector<2x32xf32>
    %144 = vector.extract_strided_slice %142 {offsets = [0, 32], sizes = [2, 32], strides = [1, 1]} : vector<2x128xf32> to vector<2x32xf32>
    %145 = vector.extract_strided_slice %142 {offsets = [0, 96], sizes = [2, 32], strides = [1, 1]} : vector<2x128xf32> to vector<2x32xf32>
    %146 = vector.extract_strided_slice %137 {offsets = [0, 64], sizes = [2, 32], strides = [1, 1]} : vector<2x128xf32> to vector<2x32xf32>
    %147 = math.tanh %146 : vector<2x32xf32>
    %148 = arith.mulf %144, %132 : vector<2x32xf32>
    %149 = arith.mulf %143, %147 : vector<2x32xf32>
    %150 = arith.addf %148, %149 : vector<2x32xf32>
    %151 = math.tanh %150 : vector<2x32xf32>
    %152 = arith.mulf %145, %151 : vector<2x32xf32>
    %c0_25 = arith.constant 0 : index
    %c0_26 = arith.constant 0 : index
    %153 = vector.load %arg4[%c0_25, %c0_26] : memref<32x5xf32, #tpu.memory_space<vmem>>, vector<32x5xf32>
    %cst_27 = arith.constant dense<0.000000e+00> : vector<2x5xf32>
    %154 = tpu.matmul %152, %153, %cst_27 {dimension_numbers = #tpu.dot_dimension_numbers<[1], [0], [0], [1], [0, 0, 1, 1], [], []>} : vector<2x32xf32>, vector<32x5xf32>, vector<2x5xf32> -> vector<2x5xf32>
    %c0_28 = arith.constant 0 : index
    %c0_29 = arith.constant 0 : index
    %155 = vector.load %arg5[%c0_28, %c0_29] : memref<1x5xf32, #tpu.memory_space<vmem>>, vector<1x5xf32>
    %156 = vector.broadcast %155 : vector<1x5xf32> to vector<2x5xf32>
    %157 = arith.addf %154, %156 : vector<2x5xf32>
    %cst_30 = arith.constant dense<0xFF800000> : vector<2xf32>
    %158 = vector.multi_reduction <maximumf>, %157, %cst_30 [1] : vector<2x5xf32> to vector<2xf32>
    %159 = vector.shape_cast %158 : vector<2xf32> to vector<2x1xf32>
    %160 = vector.broadcast %159 : vector<2x1xf32> to vector<2x5xf32>
    %161 = arith.subf %157, %160 : vector<2x5xf32>
    %162 = math.exp %161 : vector<2x5xf32>
    %cst_31 = arith.constant dense<0.000000e+00> : vector<2xf32>
    %163 = vector.multi_reduction <add>, %162, %cst_31 [1] : vector<2x5xf32> to vector<2xf32>
    %164 = vector.shape_cast %163 : vector<2xf32> to vector<2x1xf32>
    %165 = math.log %164 : vector<2x1xf32>
    %166 = vector.broadcast %165 : vector<2x1xf32> to vector<2x5xf32>
    %167 = arith.subf %161, %166 : vector<2x5xf32>
    %c0_32 = arith.constant 0 : index
    %c0_33 = arith.constant 0 : index
    %168 = vector.load %arg6[%c0_32, %c0_33] : memref<2x5xf32, #tpu.memory_space<vmem>>, vector<2x5xf32>
    tpu.vector_store %arg6[%c0_32, %c0_33], %167 {strides = array<i32>} : memref<2x5xf32, #tpu.memory_space<vmem>>, vector<2x5xf32>,
    return
  }
}

</mosaic_0001>

<llo_original>
// kernel: tpu_custom_call.1
$region0: #{tpu_custom_call.1}
  #allocation0 [shape = 'u32[]', space=smem, size = 0x4, offset = 0x4, fixed_abs, tag = 'smem constant byte address 0x4 - core index']
  #allocation1 [shape = 'u32[144,128]{1,0:T(1,128)}', space=vmem, size = 0x12000, scoped, tag = 'internal scratch']
  %s0 = inlined_call_operand.hbm [shape: f32[16,16], index: 0, kind: input, shape index: {}]
  %s1 = inlined_call_operand.hbm [shape: f32[16,128], index: 1, kind: input, shape index: {}]
  %s2 = inlined_call_operand.vmem [shape: f32[32,128], index: 2, kind: input, shape index: {}]
  %s3 = inlined_call_operand.vmem [shape: f32[1,128], index: 3, kind: input, shape index: {}]
  %s4 = inlined_call_operand.vmem [shape: f32[32,5], index: 4, kind: input, shape index: {}]
  %s5 = inlined_call_operand.vmem [shape: f32[1,5], index: 5, kind: input, shape index: {}]
  %s6 = inlined_call_operand.hbm [shape: f32[2,5], index: 6, kind: output, shape index: {}]
  %s7 = sld [smem:[#allocation0]]
  $region42: #{tpu_custom_call.1} parent=0
    _
  %s9 = ssub.s32 1, %s7
  %s10 = scalar_select 0, %s9, %s7
  $region1: #{tpu_custom_call.1} parent=0
    #allocation2 [shape = 'u8[8192]{0}', space=vmem, size = 0x2000, scoped, tag = 'input window, operand 0, single buffered']
    #allocation3 [shape = 's32[1]{0}', space=sflag, size = 0x4, scoped, tag = 'scoped memory for tpu_custom_call.1']
    #allocation4 [shape = 's32[1]{0}', space=sflag, size = 0x4, scoped, tag = 'scoped memory for tpu_custom_call.1']
    #allocation5 [shape = 'u8[8192]{0}', space=vmem, size = 0x2000, scoped, tag = 'input window, operand 1, single buffered']
    #allocation6 [shape = 's32[1]{0}', space=sflag, size = 0x4, scoped, tag = 'scoped memory for tpu_custom_call.1']
    #allocation7 [shape = 'u8[1024]{0}', space=vmem, size = 0x400, scoped, tag = 'output window, operand 0, single buffered']
    %11 = vsyncpa [#allocation3], 0
    %12 = vsyncpa [#allocation6], 0
    %13 = vsyncpa [#allocation4], 0
    // Predicated region
    $region2: #{tpu_custom_call.1} parent=1 // pred_check
      _
    $region3: #{tpu_custom_call.1} parent=1 // pred_check_branch
      %15 = sbr.rel (0) target = $region5
    $region4: #{tpu_custom_call.1} parent=1 // pred_region
      %s17 = ssub.s32 256, 256
      %18 = vsyncadd [#allocation3], %s17
      %s19 = sshll.u32 [#allocation2], 4
      %s20 = int_to_ptr.vmem [resolvable:$true] %s19
      %25 = dma.hbm_to_vmem [thread:$0]  %s0, 256, %s20, [#allocation3], 128, 128, 8
    $region5: #{tpu_custom_call.1} parent=1 // pred_fallthru
      _
    // Predicated region
    $region6: #{tpu_custom_call.1} parent=1 // pred_check
      _
    $region7: #{tpu_custom_call.1} parent=1 // pred_check_branch
      %27 = sbr.rel (0) target = $region9
    $region8: #{tpu_custom_call.1} parent=1 // pred_region
      %s29 = ssub.s32 256, 256
      %30 = vsyncadd [#allocation6], %s29
      %s31 = sshll.u32 [#allocation5], 4
      %s32 = int_to_ptr.vmem [resolvable:$true] %s31
      %37 = dma.hbm_to_vmem [thread:$0]  %s1, 256, %s32, [#allocation6], 128, 128, 8
    $region9: #{tpu_custom_call.1} parent=1 // pred_fallthru
      _
    // Predicated region
    $region10: #{tpu_custom_call.1} parent=1 // pred_check
      _
    $region11: #{tpu_custom_call.1} parent=1 // pred_check_branch
      %39 = sbr.rel (0) target = $region13
    $region12: #{tpu_custom_call.1} parent=1 // pred_region
      _
    $region13: #{tpu_custom_call.1} parent=1 // pred_fallthru
      _
    // Predicated region
    $region14: #{tpu_custom_call.1} parent=1 // pred_check
      _
    $region15: #{tpu_custom_call.1} parent=1 // pred_check_branch
      %41 = sbr.rel (0) target = $region17
    $region16: #{tpu_custom_call.1} parent=1 // pred_region
      _
    $region17: #{tpu_custom_call.1} parent=1 // pred_fallthru
      _
    // Predicated region
    $region18: #{tpu_custom_call.1} parent=1 // pred_check
      _
    $region19: #{tpu_custom_call.1} parent=1 // pred_check_branch
      %43 = sbr.rel (0) target = $region21
    $region20: #{tpu_custom_call.1} parent=1 // pred_region
      _
    $region21: #{tpu_custom_call.1} parent=1 // pred_fallthru
      _
    // Predicated region
    $region22: #{tpu_custom_call.1} parent=1 // pred_check
      _
    $region23: #{tpu_custom_call.1} parent=1 // pred_check_branch
      %45 = sbr.rel (0) target = $region25
    $region24: #{tpu_custom_call.1} parent=1 // pred_region
      _
    $region25: #{tpu_custom_call.1} parent=1 // pred_fallthru
      _
    // Predicated region
    $region26: #{tpu_custom_call.1} parent=1 // pred_check
      _
    $region27: #{tpu_custom_call.1} parent=1 // pred_check_branch
      %47 = sbr.rel (0) target = $region29
    $region28: #{tpu_custom_call.1} parent=1 // pred_region
      %48 = dma.done [#allocation3], 256
    $region29: #{tpu_custom_call.1} parent=1 // pred_fallthru
      _
    // Predicated region
    $region30: #{tpu_custom_call.1} parent=1 // pred_check
      _
    $region31: #{tpu_custom_call.1} parent=1 // pred_check_branch
      %50 = sbr.rel (0) target = $region33
    $region32: #{tpu_custom_call.1} parent=1 // pred_region
      %51 = dma.done [#allocation6], 256
    $region33: #{tpu_custom_call.1} parent=1 // pred_fallthru
      _
    %v52 = vld [vmem:[#allocation2] sm:$0xff]
    %v53 = vld [vmem:[#allocation2 + $0x8] sm:$0xff]
    %v54 = vld [vmem:[#allocation5] sm:$0xff]
    %v55 = vld [vmem:[#allocation5 + $0x8] sm:$0xff]
    %v56 = vld [vmem:[%s3] sm:$0x1]
    %v58 = vlaneseq
    %v59 = vshrl.u32 %v58, 7
    %v60 = vsub.s32 0, %v59
    %v61 = vrot.slane %v56, %v60
    %vm63 = vcmask 130048
    %v65 = vsel %vm63, %v52, 0
    %v68 = vsel %vm63, %v53, 0
    %70 = vmatprep.subr.mxu0 0.0
    %71 = vmatpush1.msra.mxu0 0.0
    %72 = vmatprep.subr.mxu0 0.0
    %73 = vmatpush1.msra.mxu0 0.0
    %74 = vmatprep.subr.mxu0 0.0
    %75 = vmatpush1.msra.mxu0 0.0
    %76 = vmatprep.subr.mxu0 0.0
    %77 = vmatpush1.msra.mxu0 0.0
    %78 = vmatprep.subr.mxu0 0.0
    %79 = vmatpush1.msra.mxu0 0.0
    %80 = vmatprep.subr.mxu0 0.0
    %81 = vmatpush1.msra.mxu0 0.0
    %82 = vmatprep.subr.mxu0 0.0
    %83 = vmatpush1.msra.mxu0 0.0
    %84 = vmatprep.subr.mxu0 0.0
    %85 = vmatpush1.msra.mxu0 0.0
    %86 = vmatprep.subr.mxu0 0.0
    %87 = vmatpush1.msra.mxu0 0.0
    %88 = vmatprep.subr.mxu0 0.0
    %89 = vmatpush1.msra.mxu0 0.0
    %90 = vmatprep.subr.mxu0 0.0
    %91 = vmatpush1.msra.mxu0 0.0
    %92 = vmatprep.subr.mxu0 0.0
    %93 = vmatpush1.msra.mxu0 0.0
    %94 = vmatprep.subr.mxu0 0.0
    %95 = vmatpush1.msra.mxu0 0.0
    %96 = vmatprep.subr.mxu0 0.0
    %97 = vmatpush1.msra.mxu0 0.0
    %98 = vmatprep.subr.mxu0 0.0
    %99 = vmatpush1.msra.mxu0 %v55
    %100 = vmatprep.subr.mxu0 0.0
    %101 = vmatpush1.msra.mxu0 %v54
    %102 = vmatprep.subr.mxu0 0.0
    %103 = vmatpush2.msra.mxu0 0.0
    %104 = vmatprep.subr.mxu0 0.0
    %105 = vmatpush2.msra.mxu0 0.0
    %106 = vmatprep.subr.mxu0 0.0
    %107 = vmatpush2.msra.mxu0 0.0
    %108 = vmatprep.subr.mxu0 0.0
    %109 = vmatpush2.msra.mxu0 0.0
    %110 = vmatprep.subr.mxu0 0.0
    %111 = vmatpush2.msra.mxu0 0.0
    %112 = vmatprep.subr.mxu0 0.0
    %113 = vmatpush2.msra.mxu0 0.0
    %114 = vmatprep.subr.mxu0 0.0
    %115 = vmatpush2.msra.mxu0 0.0
    %116 = vmatprep.subr.mxu0 0.0
    %117 = vmatpush2.msra.mxu0 0.0
    %118 = vmatprep.subr.mxu0 0.0
    %119 = vmatpush2.msra.mxu0 0.0
    %120 = vmatprep.subr.mxu0 0.0
    %121 = vmatpush2.msra.mxu0 0.0
    %122 = vmatprep.subr.mxu0 0.0
    %123 = vmatpush2.msra.mxu0 0.0
    %124 = vmatprep.subr.mxu0 0.0
    %125 = vmatpush2.msra.mxu0 0.0
    %126 = vmatprep.subr.mxu0 0.0
    %127 = vmatpush2.msra.mxu0 0.0
    %128 = vmatprep.subr.mxu0 0.0
    %129 = vmatpush2.msra.mxu0 0.0
    %130 = vmatprep.subr.mxu0 0.0
    %131 = vmatpush2.msra.mxu0 0.0
    %132 = vmatprep.subr.mxu0 0.0
    %133 = vmatpush2.msra.mxu0 0.0
    %134 = vmatprep.mubr.f32.mxu0 0.0
    %135 = vmatmul.mubr.f32.gmra.mxu0 %v65
    %v136 = vpop.f32.mrf.mxu0
    %v137 = vadd.f32 %v61, %v136
    %v138 = vpop.f32.mrf.mxu0
    %139 = vmatprep.mubr.f32.mxu0 0.0
    %140 = vmatmul.mubr.f32.gmra.mxu0 %v68
    %v141 = vpop.f32.mrf.mxu0
    %v142 = vadd.f32 %v61, %v141
    %v143 = vpop.f32.mrf.mxu0
    %144 = vdwg.mxu0
    %v145 = vld [vmem:[%s2] sm:$0xff]
    %v146 = vld [vmem:[%s2 + $0x8] sm:$0xff]
    %v147 = vld [vmem:[%s2 + $0x10] sm:$0xff]
    %v148 = vld [vmem:[%s2 + $0x18] sm:$0xff]
    %vm149 = vcmask 261120
    %v151 = vsel %vm149, 0.0, 0
    %153 = vmatprep.subr.mxu0 0.0
    %154 = vmatpush1.msra.mxu0 0.0
    %155 = vmatprep.subr.mxu0 0.0
    %156 = vmatpush1.msra.mxu0 0.0
    %157 = vmatprep.subr.mxu0 0.0
    %158 = vmatpush1.msra.mxu0 0.0
    %159 = vmatprep.subr.mxu0 0.0
    %160 = vmatpush1.msra.mxu0 0.0
    %161 = vmatprep.subr.mxu0 0.0
    %162 = vmatpush1.msra.mxu0 0.0
    %163 = vmatprep.subr.mxu0 0.0
    %164 = vmatpush1.msra.mxu0 0.0
    %165 = vmatprep.subr.mxu0 0.0
    %166 = vmatpush1.msra.mxu0 0.0
    %167 = vmatprep.subr.mxu0 0.0
    %168 = vmatpush1.msra.mxu0 0.0
    %169 = vmatprep.subr.mxu0 0.0
    %170 = vmatpush1.msra.mxu0 0.0
    %171 = vmatprep.subr.mxu0 0.0
    %172 = vmatpush1.msra.mxu0 0.0
    %173 = vmatprep.subr.mxu0 0.0
    %174 = vmatpush1.msra.mxu0 0.0
    %175 = vmatprep.subr.mxu0 0.0
    %176 = vmatpush1.msra.mxu0 0.0
    %177 = vmatprep.subr.mxu0 0.0
    %178 = vmatpush1.msra.mxu0 %v148
    %179 = vmatprep.subr.mxu0 0.0
    %180 = vmatpush1.msra.mxu0 %v147
    %181 = vmatprep.subr.mxu0 0.0
    %182 = vmatpush1.msra.mxu0 %v146
    %183 = vmatprep.subr.mxu0 0.0
    %184 = vmatpush1.msra.mxu0 %v145
    %185 = vmatprep.subr.mxu0 0.0
    %186 = vmatpush2.msra.mxu0 0.0
    %187 = vmatprep.subr.mxu0 0.0
    %188 = vmatpush2.msra.mxu0 0.0
    %189 = vmatprep.subr.mxu0 0.0
    %190 = vmatpush2.msra.mxu0 0.0
    %191 = vmatprep.subr.mxu0 0.0
    %192 = vmatpush2.msra.mxu0 0.0
    %193 = vmatprep.subr.mxu0 0.0
    %194 = vmatpush2.msra.mxu0 0.0
    %195 = vmatprep.subr.mxu0 0.0
    %196 = vmatpush2.msra.mxu0 0.0
    %197 = vmatprep.subr.mxu0 0.0
    %198 = vmatpush2.msra.mxu0 0.0
    %199 = vmatprep.subr.mxu0 0.0
    %200 = vmatpush2.msra.mxu0 0.0
    %201 = vmatprep.subr.mxu0 0.0
    %202 = vmatpush2.msra.mxu0 0.0
    %203 = vmatprep.subr.mxu0 0.0
    %204 = vmatpush2.msra.mxu0 0.0
    %205 = vmatprep.subr.mxu0 0.0
    %206 = vmatpush2.msra.mxu0 0.0
    %207 = vmatprep.subr.mxu0 0.0
    %208 = vmatpush2.msra.mxu0 0.0
    %209 = vmatprep.subr.mxu0 0.0
    %210 = vmatpush2.msra.mxu0 0.0
    %211 = vmatprep.subr.mxu0 0.0
    %212 = vmatpush2.msra.mxu0 0.0
    %213 = vmatprep.subr.mxu0 0.0
    %214 = vmatpush2.msra.mxu0 0.0
    %215 = vmatprep.subr.mxu0 0.0
    %216 = vmatpush2.msra.mxu0 0.0
    %217 = vmatprep.mubr.f32.mxu0 0.0
    %218 = vmatmul.mubr.f32.gmra.mxu0 %v151
    %v219 = vpop.f32.mrf.mxu0
    %v220 = vadd.f32 0.0, %v219
    %v221 = vpop.f32.mrf.mxu0
    %222 = vdwg.mxu0
    %v223 = vadd.f32 %v137, %v220
    %v224 = vxor.u32 %v223, 2147483648
    %v225 = vmul.f32 %v224, 1.442695
    %v226 = vpow.pop %v225
    %v227 = vadd.f32 %v226, 1.0
    %v228 = vrcp.pop %v227
    %v229 = vmul.f32 1.0, %v228
    %v230 = vtanh.pop %v223
    %v231 = vmul.f32 %v229, 0.0
    %233 = vrot.lane.b32.xlu0 %v230, 64
    %v234 = vpop.permute.xlu0 %233
    %v236 = vmul.f32 %v229, %v234
    %238 = vrot.lane.b32.xlu0 %v236, 32
    %v239 = vpop.permute.xlu0 %238
    %v241 = vadd.f32 %v231, %v239
    %v242 = vtanh.pop %v241
    %244 = vrot.lane.b32.xlu0 %v242, 64
    %v245 = vpop.permute.xlu0 %244
    %v247 = vmul.f32 %v229, %v245
    %249 = vrot.lane.b32.xlu0 %v247, 32
    %v250 = vpop.permute.xlu0 %249
    %v251 = vsel %vm149, %v250, 0
    %253 = vmatprep.subr.mxu0 0.0
    %254 = vmatpush1.msra.mxu0 0.0
    %255 = vmatprep.subr.mxu0 0.0
    %256 = vmatpush1.msra.mxu0 0.0
    %257 = vmatprep.subr.mxu0 0.0
    %258 = vmatpush1.msra.mxu0 0.0
    %259 = vmatprep.subr.mxu0 0.0
    %260 = vmatpush1.msra.mxu0 0.0
    %261 = vmatprep.subr.mxu0 0.0
    %262 = vmatpush1.msra.mxu0 0.0
    %263 = vmatprep.subr.mxu0 0.0
    %264 = vmatpush1.msra.mxu0 0.0
    %265 = vmatprep.subr.mxu0 0.0
    %266 = vmatpush1.msra.mxu0 0.0
    %267 = vmatprep.subr.mxu0 0.0
    %268 = vmatpush1.msra.mxu0 0.0
    %269 = vmatprep.subr.mxu0 0.0
    %270 = vmatpush1.msra.mxu0 0.0
    %271 = vmatprep.subr.mxu0 0.0
    %272 = vmatpush1.msra.mxu0 0.0
    %273 = vmatprep.subr.mxu0 0.0
    %274 = vmatpush1.msra.mxu0 0.0
    %275 = vmatprep.subr.mxu0 0.0
    %276 = vmatpush1.msra.mxu0 0.0
    %277 = vmatprep.subr.mxu0 0.0
    %278 = vmatpush1.msra.mxu0 %v148
    %279 = vmatprep.subr.mxu0 0.0
    %280 = vmatpush1.msra.mxu0 %v147
    %281 = vmatprep.subr.mxu0 0.0
    %282 = vmatpush1.msra.mxu0 %v146
    %283 = vmatprep.subr.mxu0 0.0
    %284 = vmatpush1.msra.mxu0 %v145
    %285 = vmatprep.subr.mxu0 0.0
    %286 = vmatpush2.msra.mxu0 0.0
    %287 = vmatprep.subr.mxu0 0.0
    %288 = vmatpush2.msra.mxu0 0.0
    %289 = vmatprep.subr.mxu0 0.0
    %290 = vmatpush2.msra.mxu0 0.0
    %291 = vmatprep.subr.mxu0 0.0
    %292 = vmatpush2.msra.mxu0 0.0
    %293 = vmatprep.subr.mxu0 0.0
    %294 = vmatpush2.msra.mxu0 0.0
    %295 = vmatprep.subr.mxu0 0.0
    %296 = vmatpush2.msra.mxu0 0.0
    %297 = vmatprep.subr.mxu0 0.0
    %298 = vmatpush2.msra.mxu0 0.0
    %299 = vmatprep.subr.mxu0 0.0
    %300 = vmatpush2.msra.mxu0 0.0
    %301 = vmatprep.subr.mxu0 0.0
    %302 = vmatpush2.msra.mxu0 0.0
    %303 = vmatprep.subr.mxu0 0.0
    %304 = vmatpush2.msra.mxu0 0.0
    %305 = vmatprep.subr.mxu0 0.0
    %306 = vmatpush2.msra.mxu0 0.0
    %307 = vmatprep.subr.mxu0 0.0
    %308 = vmatpush2.msra.mxu0 0.0
    %309 = vmatprep.subr.mxu0 0.0
    %310 = vmatpush2.msra.mxu0 0.0
    %311 = vmatprep.subr.mxu0 0.0
    %312 = vmatpush2.msra.mxu0 0.0
    %313 = vmatprep.subr.mxu0 0.0
    %314 = vmatpush2.msra.mxu0 0.0
    %315 = vmatprep.subr.mxu0 0.0
    %316 = vmatpush2.msra.mxu0 0.0
    %317 = vmatprep.mubr.f32.mxu0 0.0
    %318 = vmatmul.mubr.f32.gmra.mxu0 %v251
    %v319 = vpop.f32.mrf.mxu0
    %v320 = vadd.f32 0.0, %v319
    %v321 = vpop.f32.mrf.mxu0
    %322 = vdwg.mxu0
    %v324 = vrot.slane %v320, 6
    %v326 = vadd.f32 %v137, %v324
    %v327 = vxor.u32 %v326, 2147483648
    %v328 = vmul.f32 %v327, 1.442695
    %v329 = vpow.pop %v328
    %v330 = vadd.f32 %v329, 1.0
    %v331 = vrcp.pop %v330
    %v332 = vmul.f32 1.0, %v331
    %v333 = vtanh.pop %v326
    %v335 = vrot.slane %v241, 6
    %v337 = vmul.f32 %v332, %v335
    %339 = vrot.lane.b32.xlu0 %v333, 64
    %v340 = vpop.permute.xlu0 %339
    %v342 = vmul.f32 %v332, %v340
    %344 = vrot.lane.b32.xlu0 %v342, 32
    %v345 = vpop.permute.xlu0 %344
    %v347 = vadd.f32 %v337, %v345
    %v348 = vtanh.pop %v347
    %350 = vrot.lane.b32.xlu0 %v348, 64
    %v351 = vpop.permute.xlu0 %350
    %v353 = vmul.f32 %v332, %v351
    %v355 = vrot.slane %v353, 2
    %356 = vrot.lane.b32.xlu0 %v355, 32
    %v357 = vpop.permute.xlu0 %356
    %v358 = vsel %vm149, %v357, 0
    %360 = vmatprep.subr.mxu0 0.0
    %361 = vmatpush1.msra.mxu0 0.0
    %362 = vmatprep.subr.mxu0 0.0
    %363 = vmatpush1.msra.mxu0 0.0
    %364 = vmatprep.subr.mxu0 0.0
    %365 = vmatpush1.msra.mxu0 0.0
    %366 = vmatprep.subr.mxu0 0.0
    %367 = vmatpush1.msra.mxu0 0.0
    %368 = vmatprep.subr.mxu0 0.0
    %369 = vmatpush1.msra.mxu0 0.0
    %370 = vmatprep.subr.mxu0 0.0
    %371 = vmatpush1.msra.mxu0 0.0
    %372 = vmatprep.subr.mxu0 0.0
    %373 = vmatpush1.msra.mxu0 0.0
    %374 = vmatprep.subr.mxu0 0.0
    %375 = vmatpush1.msra.mxu0 0.0
    %376 = vmatprep.subr.mxu0 0.0
    %377 = vmatpush1.msra.mxu0 0.0
    %378 = vmatprep.subr.mxu0 0.0
    %379 = vmatpush1.msra.mxu0 0.0
    %380 = vmatprep.subr.mxu0 0.0
    %381 = vmatpush1.msra.mxu0 0.0
    %382 = vmatprep.subr.mxu0 0.0
    %383 = vmatpush1.msra.mxu0 0.0
    %384 = vmatprep.subr.mxu0 0.0
    %385 = vmatpush1.msra.mxu0 %v148
    %386 = vmatprep.subr.mxu0 0.0
    %387 = vmatpush1.msra.mxu0 %v147
    %388 = vmatprep.subr.mxu0 0.0
    %389 = vmatpush1.msra.mxu0 %v146
    %390 = vmatprep.subr.mxu0 0.0
    %391 = vmatpush1.msra.mxu0 %v145
    %392 = vmatprep.subr.mxu0 0.0
    %393 = vmatpush2.msra.mxu0 0.0
    %394 = vmatprep.subr.mxu0 0.0
    %395 = vmatpush2.msra.mxu0 0.0
    %396 = vmatprep.subr.mxu0 0.0
    %397 = vmatpush2.msra.mxu0 0.0
    %398 = vmatprep.subr.mxu0 0.0
    %399 = vmatpush2.msra.mxu0 0.0
    %400 = vmatprep.subr.mxu0 0.0
    %401 = vmatpush2.msra.mxu0 0.0
    %402 = vmatprep.subr.mxu0 0.0
    %403 = vmatpush2.msra.mxu0 0.0
    %404 = vmatprep.subr.mxu0 0.0
    %405 = vmatpush2.msra.mxu0 0.0
    %406 = vmatprep.subr.mxu0 0.0
    %407 = vmatpush2.msra.mxu0 0.0
    %408 = vmatprep.subr.mxu0 0.0
    %409 = vmatpush2.msra.mxu0 0.0
    %410 = vmatprep.subr.mxu0 0.0
    %411 = vmatpush2.msra.mxu0 0.0
    %412 = vmatprep.subr.mxu0 0.0
    %413 = vmatpush2.msra.mxu0 0.0
    %414 = vmatprep.subr.mxu0 0.0
    %415 = vmatpush2.msra.mxu0 0.0
    %416 = vmatprep.subr.mxu0 0.0
    %417 = vmatpush2.msra.mxu0 0.0
    %418 = vmatprep.subr.mxu0 0.0
    %419 = vmatpush2.msra.mxu0 0.0
    %420 = vmatprep.subr.mxu0 0.0
    %421 = vmatpush2.msra.mxu0 0.0
    %422 = vmatprep.subr.mxu0 0.0
    %423 = vmatpush2.msra.mxu0 0.0
    %424 = vmatprep.mubr.f32.mxu0 0.0
    %425 = vmatmul.mubr.f32.gmra.mxu0 %v358
    %v426 = vpop.f32.mrf.mxu0
    %v427 = vadd.f32 0.0, %v426
    %v428 = vpop.f32.mrf.mxu0
    %429 = vdwg.mxu0
    %v431 = vrot.slane %v427, 4
    %v433 = vadd.f32 %v137, %v431
    %v434 = vxor.u32 %v433, 2147483648
    %v435 = vmul.f32 %v434, 1.442695
    %v436 = vpow.pop %v435
    %v437 = vadd.f32 %v436, 1.0
    %v438 = vrcp.pop %v437
    %v439 = vmul.f32 1.0, %v438
    %v440 = vtanh.pop %v433
    %v442 = vrot.slane %v347, 6
    %v444 = vmul.f32 %v439, %v442
    %446 = vrot.lane.b32.xlu0 %v440, 64
    %v447 = vpop.permute.xlu0 %446
    %v449 = vmul.f32 %v439, %v447
    %451 = vrot.lane.b32.xlu0 %v449, 32
    %v452 = vpop.permute.xlu0 %451
    %v454 = vadd.f32 %v444, %v452
    %v455 = vtanh.pop %v454
    %457 = vrot.lane.b32.xlu0 %v455, 64
    %v458 = vpop.permute.xlu0 %457
    %v460 = vmul.f32 %v439, %v458
    %v462 = vrot.slane %v460, 4
    %463 = vrot.lane.b32.xlu0 %v462, 32
    %v464 = vpop.permute.xlu0 %463
    %v465 = vsel %vm149, %v464, 0
    %467 = vmatprep.subr.mxu0 0.0
    %468 = vmatpush1.msra.mxu0 0.0
    %469 = vmatprep.subr.mxu0 0.0
    %470 = vmatpush1.msra.mxu0 0.0
    %471 = vmatprep.subr.mxu0 0.0
    %472 = vmatpush1.msra.mxu0 0.0
    %473 = vmatprep.subr.mxu0 0.0
    %474 = vmatpush1.msra.mxu0 0.0
    %475 = vmatprep.subr.mxu0 0.0
    %476 = vmatpush1.msra.mxu0 0.0
    %477 = vmatprep.subr.mxu0 0.0
    %478 = vmatpush1.msra.mxu0 0.0
    %479 = vmatprep.subr.mxu0 0.0
    %480 = vmatpush1.msra.mxu0 0.0
    %481 = vmatprep.subr.mxu0 0.0
    %482 = vmatpush1.msra.mxu0 0.0
    %483 = vmatprep.subr.mxu0 0.0
    %484 = vmatpush1.msra.mxu0 0.0
    %485 = vmatprep.subr.mxu0 0.0
    %486 = vmatpush1.msra.mxu0 0.0
    %487 = vmatprep.subr.mxu0 0.0
    %488 = vmatpush1.msra.mxu0 0.0
    %489 = vmatprep.subr.mxu0 0.0
    %490 = vmatpush1.msra.mxu0 0.0
    %491 = vmatprep.subr.mxu0 0.0
    %492 = vmatpush1.msra.mxu0 %v148
    %493 = vmatprep.subr.mxu0 0.0
    %494 = vmatpush1.msra.mxu0 %v147
    %495 = vmatprep.subr.mxu0 0.0
    %496 = vmatpush1.msra.mxu0 %v146
    %497 = vmatprep.subr.mxu0 0.0
    %498 = vmatpush1.msra.mxu0 %v145
    %499 = vmatprep.subr.mxu0 0.0
    %500 = vmatpush2.msra.mxu0 0.0
    %501 = vmatprep.subr.mxu0 0.0
    %502 = vmatpush2.msra.mxu0 0.0
    %503 = vmatprep.subr.mxu0 0.0
    %504 = vmatpush2.msra.mxu0 0.0
    %505 = vmatprep.subr.mxu0 0.0
    %506 = vmatpush2.msra.mxu0 0.0
    %507 = vmatprep.subr.mxu0 0.0
    %508 = vmatpush2.msra.mxu0 0.0
    %509 = vmatprep.subr.mxu0 0.0
    %510 = vmatpush2.msra.mxu0 0.0
    %511 = vmatprep.subr.mxu0 0.0
    %512 = vmatpush2.msra.mxu0 0.0
    %513 = vmatprep.subr.mxu0 0.0
    %514 = vmatpush2.msra.mxu0 0.0
    %515 = vmatprep.subr.mxu0 0.0
    %516 = vmatpush2.msra.mxu0 0.0
    %517 = vmatprep.subr.mxu0 0.0
    %518 = vmatpush2.msra.mxu0 0.0
    %519 = vmatprep.subr.mxu0 0.0
    %520 = vmatpush2.msra.mxu0 0.0
    %521 = vmatprep.subr.mxu0 0.0
    %522 = vmatpush2.msra.mxu0 0.0
    %523 = vmatprep.subr.mxu0 0.0
    %524 = vmatpush2.msra.mxu0 0.0
    %525 = vmatprep.subr.mxu0 0.0
    %526 = vmatpush2.msra.mxu0 0.0
    %527 = vmatprep.subr.mxu0 0.0
    %528 = vmatpush2.msra.mxu0 0.0
    %529 = vmatprep.subr.mxu0 0.0
    %530 = vmatpush2.msra.mxu0 0.0
    %531 = vmatprep.mubr.f32.mxu0 0.0
    %532 = vmatmul.mubr.f32.gmra.mxu0 %v465
    %v533 = vpop.f32.mrf.mxu0
    %v534 = vadd.f32 0.0, %v533
    %v535 = vpop.f32.mrf.mxu0
    %536 = vdwg.mxu0
    %v538 = vrot.slane %v534, 2
    %v540 = vadd.f32 %v137, %v538
    %v541 = vxor.u32 %v540, 2147483648
    %v542 = vmul.f32 %v541, 1.442695
    %v543 = vpow.pop %v542
    %v544 = vadd.f32 %v543, 1.0
    %v545 = vrcp.pop %v544
    %v546 = vmul.f32 1.0, %v545
    %v547 = vtanh.pop %v540
    %v549 = vrot.slane %v454, 6
    %v551 = vmul.f32 %v546, %v549
    %553 = vrot.lane.b32.xlu0 %v547, 64
    %v554 = vpop.permute.xlu0 %553
    %v556 = vmul.f32 %v546, %v554
    %558 = vrot.lane.b32.xlu0 %v556, 32
    %v559 = vpop.permute.xlu0 %558
    %v561 = vadd.f32 %v551, %v559
    %v562 = vtanh.pop %v561
    %564 = vrot.lane.b32.xlu0 %v562, 64
    %v565 = vpop.permute.xlu0 %564
    %v567 = vmul.f32 %v546, %v565
    %v569 = vrot.slane %v567, 6
    %570 = vrot.lane.b32.xlu0 %v569, 32
    %v571 = vpop.permute.xlu0 %570
    %v572 = vsel %vm149, %v571, 0
    %574 = vmatprep.subr.mxu0 0.0
    %575 = vmatpush1.msra.mxu0 0.0
    %576 = vmatprep.subr.mxu0 0.0
    %577 = vmatpush1.msra.mxu0 0.0
    %578 = vmatprep.subr.mxu0 0.0
    %579 = vmatpush1.msra.mxu0 0.0
    %580 = vmatprep.subr.mxu0 0.0
    %581 = vmatpush1.msra.mxu0 0.0
    %582 = vmatprep.subr.mxu0 0.0
    %583 = vmatpush1.msra.mxu0 0.0
    %584 = vmatprep.subr.mxu0 0.0
    %585 = vmatpush1.msra.mxu0 0.0
    %586 = vmatprep.subr.mxu0 0.0
    %587 = vmatpush1.msra.mxu0 0.0
    %588 = vmatprep.subr.mxu0 0.0
    %589 = vmatpush1.msra.mxu0 0.0
    %590 = vmatprep.subr.mxu0 0.0
    %591 = vmatpush1.msra.mxu0 0.0
    %592 = vmatprep.subr.mxu0 0.0
    %593 = vmatpush1.msra.mxu0 0.0
    %594 = vmatprep.subr.mxu0 0.0
    %595 = vmatpush1.msra.mxu0 0.0
    %596 = vmatprep.subr.mxu0 0.0
    %597 = vmatpush1.msra.mxu0 0.0
    %598 = vmatprep.subr.mxu0 0.0
    %599 = vmatpush1.msra.mxu0 %v148
    %600 = vmatprep.subr.mxu0 0.0
    %601 = vmatpush1.msra.mxu0 %v147
    %602 = vmatprep.subr.mxu0 0.0
    %603 = vmatpush1.msra.mxu0 %v146
    %604 = vmatprep.subr.mxu0 0.0
    %605 = vmatpush1.msra.mxu0 %v145
    %606 = vmatprep.subr.mxu0 0.0
    %607 = vmatpush2.msra.mxu0 0.0
    %608 = vmatprep.subr.mxu0 0.0
    %609 = vmatpush2.msra.mxu0 0.0
    %610 = vmatprep.subr.mxu0 0.0
    %611 = vmatpush2.msra.mxu0 0.0
    %612 = vmatprep.subr.mxu0 0.0
    %613 = vmatpush2.msra.mxu0 0.0
    %614 = vmatprep.subr.mxu0 0.0
    %615 = vmatpush2.msra.mxu0 0.0
    %616 = vmatprep.subr.mxu0 0.0
    %617 = vmatpush2.msra.mxu0 0.0
    %618 = vmatprep.subr.mxu0 0.0
    %619 = vmatpush2.msra.mxu0 0.0
    %620 = vmatprep.subr.mxu0 0.0
    %621 = vmatpush2.msra.mxu0 0.0
    %622 = vmatprep.subr.mxu0 0.0
    %623 = vmatpush2.msra.mxu0 0.0
    %624 = vmatprep.subr.mxu0 0.0
    %625 = vmatpush2.msra.mxu0 0.0
    %626 = vmatprep.subr.mxu0 0.0
    %627 = vmatpush2.msra.mxu0 0.0
    %628 = vmatprep.subr.mxu0 0.0
    %629 = vmatpush2.msra.mxu0 0.0
    %630 = vmatprep.subr.mxu0 0.0
    %631 = vmatpush2.msra.mxu0 0.0
    %632 = vmatprep.subr.mxu0 0.0
    %633 = vmatpush2.msra.mxu0 0.0
    %634 = vmatprep.subr.mxu0 0.0
    %635 = vmatpush2.msra.mxu0 0.0
    %636 = vmatprep.subr.mxu0 0.0
    %637 = vmatpush2.msra.mxu0 0.0
    %638 = vmatprep.mubr.f32.mxu0 0.0
    %639 = vmatmul.mubr.f32.gmra.mxu0 %v572
    %v640 = vpop.f32.mrf.mxu0
    %v641 = vadd.f32 0.0, %v640
    %v642 = vpop.f32.mrf.mxu0
    %643 = vdwg.mxu0
    %v644 = vadd.f32 %v142, %v641
    %v645 = vxor.u32 %v644, 2147483648
    %v646 = vmul.f32 %v645, 1.442695
    %v647 = vpow.pop %v646
    %v648 = vadd.f32 %v647, 1.0
    %v649 = vrcp.pop %v648
    %v650 = vmul.f32 1.0, %v649
    %v651 = vtanh.pop %v644
    %v653 = vrot.slane %v561, 6
    %v655 = vmul.f32 %v650, %v653
    %657 = vrot.lane.b32.xlu0 %v651, 64
    %v658 = vpop.permute.xlu0 %657
    %v660 = vmul.f32 %v650, %v658
    %662 = vrot.lane.b32.xlu0 %v660, 32
    %v663 = vpop.permute.xlu0 %662
    %v665 = vadd.f32 %v655, %v663
    %v666 = vtanh.pop %v665
    %668 = vrot.lane.b32.xlu0 %v666, 64
    %v669 = vpop.permute.xlu0 %668
    %v671 = vmul.f32 %v650, %v669
    %673 = vrot.lane.b32.xlu0 %v671, 32
    %v674 = vpop.permute.xlu0 %673
    %v675 = vsel %vm149, %v674, 0
    %677 = vmatprep.subr.mxu0 0.0
    %678 = vmatpush1.msra.mxu0 0.0
    %679 = vmatprep.subr.mxu0 0.0
    %680 = vmatpush1.msra.mxu0 0.0
    %681 = vmatprep.subr.mxu0 0.0
    %682 = vmatpush1.msra.mxu0 0.0
    %683 = vmatprep.subr.mxu0 0.0
    %684 = vmatpush1.msra.mxu0 0.0
    %685 = vmatprep.subr.mxu0 0.0
    %686 = vmatpush1.msra.mxu0 0.0
    %687 = vmatprep.subr.mxu0 0.0
    %688 = vmatpush1.msra.mxu0 0.0
    %689 = vmatprep.subr.mxu0 0.0
    %690 = vmatpush1.msra.mxu0 0.0
    %691 = vmatprep.subr.mxu0 0.0
    %692 = vmatpush1.msra.mxu0 0.0
    %693 = vmatprep.subr.mxu0 0.0
    %694 = vmatpush1.msra.mxu0 0.0
    %695 = vmatprep.subr.mxu0 0.0
    %696 = vmatpush1.msra.mxu0 0.0
    %697 = vmatprep.subr.mxu0 0.0
    %698 = vmatpush1.msra.mxu0 0.0
    %699 = vmatprep.subr.mxu0 0.0
    %700 = vmatpush1.msra.mxu0 0.0
    %701 = vmatprep.subr.mxu0 0.0
    %702 = vmatpush1.msra.mxu0 %v148
    %703 = vmatprep.subr.mxu0 0.0
    %704 = vmatpush1.msra.mxu0 %v147
    %705 = vmatprep.subr.mxu0 0.0
    %706 = vmatpush1.msra.mxu0 %v146
    %707 = vmatprep.subr.mxu0 0.0
    %708 = vmatpush1.msra.mxu0 %v145
    %709 = vmatprep.subr.mxu0 0.0
    %710 = vmatpush2.msra.mxu0 0.0
    %711 = vmatprep.subr.mxu0 0.0
    %712 = vmatpush2.msra.mxu0 0.0
    %713 = vmatprep.subr.mxu0 0.0
    %714 = vmatpush2.msra.mxu0 0.0
    %715 = vmatprep.subr.mxu0 0.0
    %716 = vmatpush2.msra.mxu0 0.0
    %717 = vmatprep.subr.mxu0 0.0
    %718 = vmatpush2.msra.mxu0 0.0
    %719 = vmatprep.subr.mxu0 0.0
    %720 = vmatpush2.msra.mxu0 0.0
    %721 = vmatprep.subr.mxu0 0.0
    %722 = vmatpush2.msra.mxu0 0.0
    %723 = vmatprep.subr.mxu0 0.0
    %724 = vmatpush2.msra.mxu0 0.0
    %725 = vmatprep.subr.mxu0 0.0
    %726 = vmatpush2.msra.mxu0 0.0
    %727 = vmatprep.subr.mxu0 0.0
    %728 = vmatpush2.msra.mxu0 0.0
    %729 = vmatprep.subr.mxu0 0.0
    %730 = vmatpush2.msra.mxu0 0.0
    %731 = vmatprep.subr.mxu0 0.0
    %732 = vmatpush2.msra.mxu0 0.0
    %733 = vmatprep.subr.mxu0 0.0
    %734 = vmatpush2.msra.mxu0 0.0
    %735 = vmatprep.subr.mxu0 0.0
    %736 = vmatpush2.msra.mxu0 0.0
    %737 = vmatprep.subr.mxu0 0.0
    %738 = vmatpush2.msra.mxu0 0.0
    %739 = vmatprep.subr.mxu0 0.0
    %740 = vmatpush2.msra.mxu0 0.0
    %741 = vmatprep.mubr.f32.mxu0 0.0
    %742 = vmatmul.mubr.f32.gmra.mxu0 %v675
    %v743 = vpop.f32.mrf.mxu0
    %v744 = vadd.f32 0.0, %v743
    %v745 = vpop.f32.mrf.mxu0
    %746 = vdwg.mxu0
    %v748 = vrot.slane %v744, 6
    %v750 = vadd.f32 %v142, %v748
    %v751 = vxor.u32 %v750, 2147483648
    %v752 = vmul.f32 %v751, 1.442695
    %v753 = vpow.pop %v752
    %v754 = vadd.f32 %v753, 1.0
    %v755 = vrcp.pop %v754
    %v756 = vmul.f32 1.0, %v755
    %v757 = vtanh.pop %v750
    %v759 = vrot.slane %v665, 6
    %v761 = vmul.f32 %v756, %v759
    %763 = vrot.lane.b32.xlu0 %v757, 64
    %v764 = vpop.permute.xlu0 %763
    %v766 = vmul.f32 %v756, %v764
    %768 = vrot.lane.b32.xlu0 %v766, 32
    %v769 = vpop.permute.xlu0 %768
    %v771 = vadd.f32 %v761, %v769
    %v772 = vtanh.pop %v771
    %774 = vrot.lane.b32.xlu0 %v772, 64
    %v775 = vpop.permute.xlu0 %774
    %v777 = vmul.f32 %v756, %v775
    %v779 = vrot.slane %v777, 2
    %780 = vrot.lane.b32.xlu0 %v779, 32
    %v781 = vpop.permute.xlu0 %780
    %v782 = vsel %vm149, %v781, 0
    %784 = vmatprep.subr.mxu0 0.0
    %785 = vmatpush1.msra.mxu0 0.0
    %786 = vmatprep.subr.mxu0 0.0
    %787 = vmatpush1.msra.mxu0 0.0
    %788 = vmatprep.subr.mxu0 0.0
    %789 = vmatpush1.msra.mxu0 0.0
    %790 = vmatprep.subr.mxu0 0.0
    %791 = vmatpush1.msra.mxu0 0.0
    %792 = vmatprep.subr.mxu0 0.0
    %793 = vmatpush1.msra.mxu0 0.0
    %794 = vmatprep.subr.mxu0 0.0
    %795 = vmatpush1.msra.mxu0 0.0
    %796 = vmatprep.subr.mxu0 0.0
    %797 = vmatpush1.msra.mxu0 0.0
    %798 = vmatprep.subr.mxu0 0.0
    %799 = vmatpush1.msra.mxu0 0.0
    %800 = vmatprep.subr.mxu0 0.0
    %801 = vmatpush1.msra.mxu0 0.0
    %802 = vmatprep.subr.mxu0 0.0
    %803 = vmatpush1.msra.mxu0 0.0
    %804 = vmatprep.subr.mxu0 0.0
    %805 = vmatpush1.msra.mxu0 0.0
    %806 = vmatprep.subr.mxu0 0.0
    %807 = vmatpush1.msra.mxu0 0.0
    %808 = vmatprep.subr.mxu0 0.0
    %809 = vmatpush1.msra.mxu0 %v148
    %810 = vmatprep.subr.mxu0 0.0
    %811 = vmatpush1.msra.mxu0 %v147
    %812 = vmatprep.subr.mxu0 0.0
    %813 = vmatpush1.msra.mxu0 %v146
    %814 = vmatprep.subr.mxu0 0.0
    %815 = vmatpush1.msra.mxu0 %v145
    %816 = vmatprep.subr.mxu0 0.0
    %817 = vmatpush2.msra.mxu0 0.0
    %818 = vmatprep.subr.mxu0 0.0
    %819 = vmatpush2.msra.mxu0 0.0
    %820 = vmatprep.subr.mxu0 0.0
    %821 = vmatpush2.msra.mxu0 0.0
    %822 = vmatprep.subr.mxu0 0.0
    %823 = vmatpush2.msra.mxu0 0.0
    %824 = vmatprep.subr.mxu0 0.0
    %825 = vmatpush2.msra.mxu0 0.0
    %826 = vmatprep.subr.mxu0 0.0
    %827 = vmatpush2.msra.mxu0 0.0
    %828 = vmatprep.subr.mxu0 0.0
    %829 = vmatpush2.msra.mxu0 0.0
    %830 = vmatprep.subr.mxu0 0.0
    %831 = vmatpush2.msra.mxu0 0.0
    %832 = vmatprep.subr.mxu0 0.0
    %833 = vmatpush2.msra.mxu0 0.0
    %834 = vmatprep.subr.mxu0 0.0
    %835 = vmatpush2.msra.mxu0 0.0
    %836 = vmatprep.subr.mxu0 0.0
    %837 = vmatpush2.msra.mxu0 0.0
    %838 = vmatprep.subr.mxu0 0.0
    %839 = vmatpush2.msra.mxu0 0.0
    %840 = vmatprep.subr.mxu0 0.0
    %841 = vmatpush2.msra.mxu0 0.0
    %842 = vmatprep.subr.mxu0 0.0
    %843 = vmatpush2.msra.mxu0 0.0
    %844 = vmatprep.subr.mxu0 0.0
    %845 = vmatpush2.msra.mxu0 0.0
    %846 = vmatprep.subr.mxu0 0.0
    %847 = vmatpush2.msra.mxu0 0.0
    %848 = vmatprep.mubr.f32.mxu0 0.0
    %849 = vmatmul.mubr.f32.gmra.mxu0 %v782
    %v850 = vpop.f32.mrf.mxu0
    %v851 = vadd.f32 0.0, %v850
    %v852 = vpop.f32.mrf.mxu0
    %853 = vdwg.mxu0
    %v855 = vrot.slane %v851, 4
    %v857 = vadd.f32 %v142, %v855
    %v858 = vxor.u32 %v857, 2147483648
    %v859 = vmul.f32 %v858, 1.442695
    %v860 = vpow.pop %v859
    %v861 = vadd.f32 %v860, 1.0
    %v862 = vrcp.pop %v861
    %v863 = vmul.f32 1.0, %v862
    %v864 = vtanh.pop %v857
    %v866 = vrot.slane %v771, 6
    %v868 = vmul.f32 %v863, %v866
    %870 = vrot.lane.b32.xlu0 %v864, 64
    %v871 = vpop.permute.xlu0 %870
    %v873 = vmul.f32 %v863, %v871
    %875 = vrot.lane.b32.xlu0 %v873, 32
    %v876 = vpop.permute.xlu0 %875
    %v878 = vadd.f32 %v868, %v876
    %v879 = vtanh.pop %v878
    %881 = vrot.lane.b32.xlu0 %v879, 64
    %v882 = vpop.permute.xlu0 %881
    %v884 = vmul.f32 %v863, %v882
    %v886 = vrot.slane %v884, 4
    %887 = vrot.lane.b32.xlu0 %v886, 32
    %v888 = vpop.permute.xlu0 %887
    %v889 = vsel %vm149, %v888, 0
    %891 = vmatprep.subr.mxu0 0.0
    %892 = vmatpush1.msra.mxu0 0.0
    %893 = vmatprep.subr.mxu0 0.0
    %894 = vmatpush1.msra.mxu0 0.0
    %895 = vmatprep.subr.mxu0 0.0
    %896 = vmatpush1.msra.mxu0 0.0
    %897 = vmatprep.subr.mxu0 0.0
    %898 = vmatpush1.msra.mxu0 0.0
    %899 = vmatprep.subr.mxu0 0.0
    %900 = vmatpush1.msra.mxu0 0.0
    %901 = vmatprep.subr.mxu0 0.0
    %902 = vmatpush1.msra.mxu0 0.0
    %903 = vmatprep.subr.mxu0 0.0
    %904 = vmatpush1.msra.mxu0 0.0
    %905 = vmatprep.subr.mxu0 0.0
    %906 = vmatpush1.msra.mxu0 0.0
    %907 = vmatprep.subr.mxu0 0.0
    %908 = vmatpush1.msra.mxu0 0.0
    %909 = vmatprep.subr.mxu0 0.0
    %910 = vmatpush1.msra.mxu0 0.0
    %911 = vmatprep.subr.mxu0 0.0
    %912 = vmatpush1.msra.mxu0 0.0
    %913 = vmatprep.subr.mxu0 0.0
    %914 = vmatpush1.msra.mxu0 0.0
    %915 = vmatprep.subr.mxu0 0.0
    %916 = vmatpush1.msra.mxu0 %v148
    %917 = vmatprep.subr.mxu0 0.0
    %918 = vmatpush1.msra.mxu0 %v147
    %919 = vmatprep.subr.mxu0 0.0
    %920 = vmatpush1.msra.mxu0 %v146
    %921 = vmatprep.subr.mxu0 0.0
    %922 = vmatpush1.msra.mxu0 %v145
    %923 = vmatprep.subr.mxu0 0.0
    %924 = vmatpush2.msra.mxu0 0.0
    %925 = vmatprep.subr.mxu0 0.0
    %926 = vmatpush2.msra.mxu0 0.0
    %927 = vmatprep.subr.mxu0 0.0
    %928 = vmatpush2.msra.mxu0 0.0
    %929 = vmatprep.subr.mxu0 0.0
    %930 = vmatpush2.msra.mxu0 0.0
    %931 = vmatprep.subr.mxu0 0.0
    %932 = vmatpush2.msra.mxu0 0.0
    %933 = vmatprep.subr.mxu0 0.0
    %934 = vmatpush2.msra.mxu0 0.0
    %935 = vmatprep.subr.mxu0 0.0
    %936 = vmatpush2.msra.mxu0 0.0
    %937 = vmatprep.subr.mxu0 0.0
    %938 = vmatpush2.msra.mxu0 0.0
    %939 = vmatprep.subr.mxu0 0.0
    %940 = vmatpush2.msra.mxu0 0.0
    %941 = vmatprep.subr.mxu0 0.0
    %942 = vmatpush2.msra.mxu0 0.0
    %943 = vmatprep.subr.mxu0 0.0
    %944 = vmatpush2.msra.mxu0 0.0
    %945 = vmatprep.subr.mxu0 0.0
    %946 = vmatpush2.msra.mxu0 0.0
    %947 = vmatprep.subr.mxu0 0.0
    %948 = vmatpush2.msra.mxu0 0.0
    %949 = vmatprep.subr.mxu0 0.0
    %950 = vmatpush2.msra.mxu0 0.0
    %951 = vmatprep.subr.mxu0 0.0
    %952 = vmatpush2.msra.mxu0 0.0
    %953 = vmatprep.subr.mxu0 0.0
    %954 = vmatpush2.msra.mxu0 0.0
    %955 = vmatprep.mubr.f32.mxu0 0.0
    %956 = vmatmul.mubr.f32.gmra.mxu0 %v889
    %v957 = vpop.f32.mrf.mxu0
    %v958 = vadd.f32 0.0, %v957
    %v959 = vpop.f32.mrf.mxu0
    %960 = vdwg.mxu0
    %v962 = vrot.slane %v958, 2
    %v964 = vadd.f32 %v142, %v962
    %v965 = vxor.u32 %v964, 2147483648
    %v966 = vmul.f32 %v965, 1.442695
    %v967 = vpow.pop %v966
    %v968 = vadd.f32 %v967, 1.0
    %v969 = vrcp.pop %v968
    %v970 = vmul.f32 1.0, %v969
    %v971 = vtanh.pop %v964
    %v973 = vrot.slane %v878, 6
    %v975 = vmul.f32 %v970, %v973
    %977 = vrot.lane.b32.xlu0 %v971, 64
    %v978 = vpop.permute.xlu0 %977
    %v980 = vmul.f32 %v970, %v978
    %982 = vrot.lane.b32.xlu0 %v980, 32
    %v983 = vpop.permute.xlu0 %982
    %v985 = vadd.f32 %v975, %v983
    %v986 = vtanh.pop %v985
    %988 = vrot.lane.b32.xlu0 %v986, 64
    %v989 = vpop.permute.xlu0 %988
    %v991 = vmul.f32 %v970, %v989
    %v992 = vld [vmem:[%s4] sm:$0xff]
    %v993 = vld [vmem:[%s4 + $0x8] sm:$0xff]
    %v994 = vld [vmem:[%s4 + $0x10] sm:$0xff]
    %v995 = vld [vmem:[%s4 + $0x18] sm:$0xff]
    %v996 = vld [vmem:[%s5] sm:$0x1]
    %v998 = vlaneseq
    %v999 = vshrl.u32 %v998, 7
    %v1000 = vsub.s32 0, %v999
    %v1001 = vrot.slane %v996, %v1000
    %v1004 = vrot.slane %v991, 6
    %1005 = vrot.lane.b32.xlu0 %v1004, 32
    %v1006 = vpop.permute.xlu0 %1005
    %v1007 = vsel %vm149, %v1006, 0
    %1009 = vmatprep.subr.mxu0 0.0
    %1010 = vmatpush1.msra.mxu0 0.0
    %1011 = vmatprep.subr.mxu0 0.0
    %1012 = vmatpush1.msra.mxu0 0.0
    %1013 = vmatprep.subr.mxu0 0.0
    %1014 = vmatpush1.msra.mxu0 0.0
    %1015 = vmatprep.subr.mxu0 0.0
    %1016 = vmatpush1.msra.mxu0 0.0
    %1017 = vmatprep.subr.mxu0 0.0
    %1018 = vmatpush1.msra.mxu0 0.0
    %1019 = vmatprep.subr.mxu0 0.0
    %1020 = vmatpush1.msra.mxu0 0.0
    %1021 = vmatprep.subr.mxu0 0.0
    %1022 = vmatpush1.msra.mxu0 0.0
    %1023 = vmatprep.subr.mxu0 0.0
    %1024 = vmatpush1.msra.mxu0 0.0
    %1025 = vmatprep.subr.mxu0 0.0
    %1026 = vmatpush1.msra.mxu0 0.0
    %1027 = vmatprep.subr.mxu0 0.0
    %1028 = vmatpush1.msra.mxu0 0.0
    %1029 = vmatprep.subr.mxu0 0.0
    %1030 = vmatpush1.msra.mxu0 0.0
    %1031 = vmatprep.subr.mxu0 0.0
    %1032 = vmatpush1.msra.mxu0 0.0
    %1033 = vmatprep.subr.mxu0 0.0
    %1034 = vmatpush1.msra.mxu0 %v995
    %1035 = vmatprep.subr.mxu0 0.0
    %1036 = vmatpush1.msra.mxu0 %v994
    %1037 = vmatprep.subr.mxu0 0.0
    %1038 = vmatpush1.msra.mxu0 %v993
    %1039 = vmatprep.subr.mxu0 0.0
    %1040 = vmatpush1.msra.mxu0 %v992
    %1041 = vmatprep.subr.mxu0 0.0
    %1042 = vmatpush2.msra.mxu0 0.0
    %1043 = vmatprep.subr.mxu0 0.0
    %1044 = vmatpush2.msra.mxu0 0.0
    %1045 = vmatprep.subr.mxu0 0.0
    %1046 = vmatpush2.msra.mxu0 0.0
    %1047 = vmatprep.subr.mxu0 0.0
    %1048 = vmatpush2.msra.mxu0 0.0
    %1049 = vmatprep.subr.mxu0 0.0
    %1050 = vmatpush2.msra.mxu0 0.0
    %1051 = vmatprep.subr.mxu0 0.0
    %1052 = vmatpush2.msra.mxu0 0.0
    %1053 = vmatprep.subr.mxu0 0.0
    %1054 = vmatpush2.msra.mxu0 0.0
    %1055 = vmatprep.subr.mxu0 0.0
    %1056 = vmatpush2.msra.mxu0 0.0
    %1057 = vmatprep.subr.mxu0 0.0
    %1058 = vmatpush2.msra.mxu0 0.0
    %1059 = vmatprep.subr.mxu0 0.0
    %1060 = vmatpush2.msra.mxu0 0.0
    %1061 = vmatprep.subr.mxu0 0.0
    %1062 = vmatpush2.msra.mxu0 0.0
    %1063 = vmatprep.subr.mxu0 0.0
    %1064 = vmatpush2.msra.mxu0 0.0
    %1065 = vmatprep.subr.mxu0 0.0
    %1066 = vmatpush2.msra.mxu0 0.0
    %1067 = vmatprep.subr.mxu0 0.0
    %1068 = vmatpush2.msra.mxu0 0.0
    %1069 = vmatprep.subr.mxu0 0.0
    %1070 = vmatpush2.msra.mxu0 0.0
    %1071 = vmatprep.subr.mxu0 0.0
    %1072 = vmatpush2.msra.mxu0 0.0
    %1073 = vmatprep.mubr.f32.mxu0 0.0
    %1074 = vmatmul.mubr.f32.gmra.mxu0 %v1007
    %v1075 = vpop.f32.mrf.mxu0
    %v1076 = vadd.f32 %v1001, %v1075
    %v1077 = vpop.f32.mrf.mxu0
    %1078 = vdwg.mxu0
    %vm1079 = vcmask 33792
    %v1080 = vsel %vm1079, %v1076, -inf
    %1081 = vmax.xlane.f32.xlu0 %v1080
    %v1082 = vpop.xlane.xlu0 %1081
    %v1083 = vsub.f32 %v1076, %v1082
    %v1084 = vmul.f32 %v1083, 1.442695
    %v1085 = vpow.pop %v1084
    %v1086 = vsel %vm1079, %v1085, 0.0
    %1087 = vadd.xlane.f32.xlu0 %v1086
    %v1088 = vpop.xlane.xlu0 %1087
    %v1089 = vlog2.pop %v1088
    %v1090 = vmul.f32 %v1089, 0.6931472
    %v1091 = vsub.f32 %v1083, %v1090
    %1092 = vst.msk [vmem:[#allocation7] sm:$0x3] %vm1079, %v1091
    // Predicated region
    $region34: #{tpu_custom_call.1} parent=1 // pred_check
      _
    $region35: #{tpu_custom_call.1} parent=1 // pred_check_branch
      %1094 = sbr.rel (0) target = $region37
    $region36: #{tpu_custom_call.1} parent=1 // pred_region
      %s1096 = ssub.s32 32, 32
      %1097 = vsyncadd [#allocation4], %s1096
      %s1099 = sshll.u32 [#allocation7], 4
      %s1100 = int_to_ptr.vmem [resolvable:$true] %s1099
      %1102 = dma.vmem_to_hbm [thread:$0]  %s1100, 32, %s6, [#allocation4]
    $region37: #{tpu_custom_call.1} parent=1 // pred_fallthru
      _
    // Predicated region
    $region38: #{tpu_custom_call.1} parent=1 // pred_check
      _
    $region39: #{tpu_custom_call.1} parent=1 // pred_check_branch
      %1104 = sbr.rel (0) target = $region41
    $region40: #{tpu_custom_call.1} parent=1 // pred_region
      %1105 = dma.done [#allocation4], 32
    $region41: #{tpu_custom_call.1} parent=1 // pred_fallthru
      _
    %1106 = vsyncpa [#allocation3], 1
    %1107 = vsyncpa [#allocation6], 1
    %1108 = vsyncpa [#allocation4], 1

</llo_original>
